<compile_context>
chip_gen: v6e
topology: v6e:2x2x1
jax: 0.10.0
libtpu: 0.0.40
codegen_flags: <defaults>
</compile_context>

<pallas_src>
import jax
import jax.numpy as jnp
from jax.experimental import pallas as pl
from jax.experimental.pallas import tpu as pltpu


def _round_up(x, m):
    return ((x + m - 1) // m) * m


# ----------------------------------------------------------------------------
# Pallas kernel: denoise -> quantile-loss gradient -> score -> guided update
# (transposed layout: positions on lanes, hidden units / samples on sublanes)
# ----------------------------------------------------------------------------
def _guidance_score_kernel(scal_ref,        # SMEM (2,): [guidance scale, b2]
                           q_ref,           # (S_pad, 1) quantile levels
                           slab_ref,        # (R, TM)  rows: y0,obs,mask,sp,feat...
                           wext_ref,        # (H, R)   hidden-layer weights
                           b1_ref,          # (H, 1)
                           wout_ref,        # (2, 2H)  [[w2,0],[0,w1y*w2]]
                           out_ref):        # (S_pad, TM)
    scale = scal_ref[0]
    b2 = scal_ref[1]

    slab = slab_ref[...]                      # one packed load
    y0 = slab[0:1, :]                         # masked observation (= y)
    obs = slab[1:2, :]
    mask = slab[2:3, :]
    sp = slab[3:4, :]                         # per-position output scale

    # --- fast_denoise(y, t, features): hidden layer as ONE MXU dot over the
    #     whole packed slab (zero weight columns for obs/mask/sp/pad rows). ---
    h_pre = (jnp.dot(wext_ref[...], slab, preferred_element_type=jnp.float32)
             + b1_ref[...])                   # (H, TM)

    # --- fused output matmul: row 0 -> denoised (minus b2), row 1 -> dd/dy ---
    hr = jnp.concatenate([jnp.maximum(h_pre, 0.0),
                          (h_pre > 0.0).astype(jnp.float32)], axis=0)   # (2H, TM)
    dd = jnp.dot(wout_ref[...], hr, preferred_element_type=jnp.float32)  # (2, TM)
    d = dd[0:1, :] + b2                       # denoised
    dd_dy = dd[1:2, :]                        # d(denoised)/dy

    # --- quantile-loss gradient + guided update, folded epilogue -------------
    #   g_e = dloss/de = q - (e < 0);   score = g_e * mask * dd_dy
    #   out = (y0 + scale * score) * sp = sp*y0 + g_e * (scale*mask*sp*dd_dy)
    e = obs - d                                           # (1, TM)
    r = (scale * mask * sp) * dd_dy                       # (1, TM)
    g_e = q_ref[...] - (e < 0.0).astype(jnp.float32)      # (S_pad, TM)

    # TODO(synk): `Guidance.guide` is abstract in the reference; realized here
    # as a single score-guided update step (subclasses iterate this).
    out_ref[...] = y0 * sp + g_e * r


def guided_prediction(observation, observation_mask, scale_per_batch, features,
                      q_levels, params, scale, *, max_tile_m=8192):
    """Score-guided update (already multiplied by scale_params).

    observation, observation_mask: (B, L)   -- NOT repeated over samples
    scale_per_batch:               (B,)     mean-scale per batch element
    features:                      (B, L, F)
    q_levels:                      (S,)     per-sample quantile levels
    Returns (B, S, L) float32 == (y0 + scale*score) * scale_params.
    """
    B, L = observation.shape
    F = features.shape[-1]
    S = q_levels.shape[0]
    w1, b1, w2, b2 = params
    H = w1.shape[1]

    # --- tile selection: minimize lane padding, keep >=2 parallel steps ------
    M = B * L
    m128 = _round_up(M, 128)
    n_tiles = max(1, -(-m128 // max_tile_m))
    if n_tiles == 1 and m128 >= 256:
        n_tiles = 2                           # keep both v7x TensorCores busy
    tile_m = _round_up(-(-m128 // n_tiles), 128)
    m_pad = n_tiles * tile_m

    s_pad = _round_up(S, 8)                   # unmasked full-vreg output stores
    n_rows = _round_up(4 + F, 8)              # packed slab rows (sublane tile)

    # --- one packed, lane-dense input slab: rows [y0, obs, mask, sp, feat..] -
    obs = observation.reshape(1, M).astype(jnp.float32)
    mask = observation_mask.reshape(1, M).astype(jnp.float32)
    sp_row = jnp.broadcast_to(scale_per_batch.reshape(B, 1).astype(jnp.float32),
                              (B, L)).reshape(1, M)
    y0 = obs * mask
    feat_t = jnp.transpose(features, (2, 0, 1)).reshape(F, M).astype(jnp.float32)
    slab = jnp.concatenate([y0, obs, mask, sp_row, feat_t], axis=0)     # (4+F, M)
    slab = jnp.pad(slab, ((0, n_rows - (4 + F)), (0, m_pad - M)))

    # --- weights (resident in VMEM via constant index maps) ------------------
    wext = jnp.zeros((H, n_rows), jnp.float32)
    wext = wext.at[:, 0].set(w1[0, :])                        # y column
    wext = wext.at[:, 4:4 + F].set(w1[1:, :].T)               # feature columns
    b1c = b1.reshape(H, 1).astype(jnp.float32)
    wout = jnp.zeros((2, 2 * H), jnp.float32)
    wout = wout.at[0, :H].set(w2[:, 0])                       # denoised row
    wout = wout.at[1, H:].set(w1[0, :] * w2[:, 0])            # dd/dy row

    q_col = jnp.pad(q_levels.astype(jnp.float32),
                    (0, s_pad - S)).reshape(s_pad, 1)
    scalars = jnp.stack([jnp.asarray(scale, jnp.float32),
                         jnp.asarray(b2, jnp.float32).reshape(())])      # SMEM

    # --- cost / VMEM hints ----------------------------------------------------
    flops = int(m_pad) * (2 * H * n_rows + 2 * 2 * (2 * H) + 4 * H + 6 * s_pad)
    bytes_accessed = 4 * (int(m_pad) * (n_rows + s_pad)
                          + H * n_rows + H + 2 * 2 * H + s_pad)
    vmem_est = 4 * tile_m * (2 * n_rows + 4 * H + 3 * s_pad)
    vmem_limit = int(min(max(2 * vmem_est, 16 * 2**20), 56 * 2**20))

    out = pl.pallas_call(
        _guidance_score_kernel,
        out_shape=jax.ShapeDtypeStruct((s_pad, m_pad), jnp.float32),
        grid=(n_tiles,),
        in_specs=[
            pl.BlockSpec(memory_space=pltpu.MemorySpace.SMEM),   # [scale, b2]
            pl.BlockSpec((s_pad, 1), lambda i: (0, 0)),          # quantiles
            pl.BlockSpec((n_rows, tile_m), lambda i: (0, i)),    # packed slab
            pl.BlockSpec((H, n_rows), lambda i: (0, 0)),         # W_ext
            pl.BlockSpec((H, 1), lambda i: (0, 0)),              # b1
            pl.BlockSpec((2, 2 * H), lambda i: (0, 0)),          # W_out
        ],
        out_specs=pl.BlockSpec((s_pad, tile_m), lambda i: (0, i)),
        compiler_params=pltpu.CompilerParams(
            dimension_semantics=("parallel",),
            vmem_limit_bytes=vmem_limit),
        cost_estimate=pl.CostEstimate(flops=flops, transcendentals=0,
                                      bytes_accessed=bytes_accessed),
    )(scalars, q_col, slab, wext, b1c, wout)

    pred = out[:S, :M].reshape(S, B, L)          # drop pad rows / pad lanes
    return jnp.transpose(pred, (1, 0, 2))        # (B, S, L)


# ----------------------------------------------------------------------------
# Forward-pass glue (mirrors Guidance.forward)
# ----------------------------------------------------------------------------
def guidance_forward(past_target, past_observed_values, past_time_feat,
                     future_time_feat, *, context_length, prediction_length,
                     num_samples, denoiser_params, base_scale=1.0,
                     return_full=False):
    B = past_target.shape[0]
    C, P, S = context_length, prediction_length, num_samples
    L = C + P

    # --- model._extract_features (synthetic TSDiff: mean scaling, no lags) --
    ctx_target = past_target[:, -C:]
    ctx_mask = past_observed_values[:, -C:]
    denom = jnp.maximum(ctx_mask.sum(-1), 1.0)
    scale_params = jnp.sum(jnp.abs(ctx_target) * ctx_mask, -1) / denom
    scale_params = jnp.maximum(scale_params, 1e-3)                       # (B,)
    observation = jnp.concatenate(
        [ctx_target / scale_params[:, None], jnp.zeros((B, P), jnp.float32)],
        axis=1)                                                          # (B,L)
    observation_mask = jnp.concatenate(
        [ctx_mask, jnp.zeros((B, P), jnp.float32)], axis=1)              # (B,L)
    features = jnp.concatenate([past_time_feat[:, -C:], future_time_feat],
                               axis=1)                                   # (B,L,F)

    # quantile levels: torch.arange(S).repeat(B) is batch-independent; the S×
    # repeat_interleave of obs/mask/features is done implicitly in-kernel.
    q_levels = (jnp.arange(S, dtype=jnp.float32) + 1.0) / (S + 1)

    # kernel output already includes the trailing `* scale_params`
    pred_full = guided_prediction(observation, observation_mask, scale_params,
                                  features, q_levels, denoiser_params,
                                  base_scale)                            # (B,S,L)
    pred = pred_full[..., L - P:]                                        # (B,S,P)
    if return_full:
        return pred, pred_full
    return pred


# ----------------------------------------------------------------------------
# Pure-JAX reference (mirrors the original per-row computation, with the
# explicit repeat_interleave) used only as a correctness check.
# ----------------------------------------------------------------------------
def _reference_forward(past_target, past_observed, past_time_feat,
                       future_time_feat, C, P, S, params, base_scale):
    w1, b1, w2, b2 = params
    B = past_target.shape[0]
    L = C + P
    ctx_t = past_target[:, -C:]
    ctx_m = past_observed[:, -C:]
    denom = jnp.maximum(ctx_m.sum(-1), 1.0)
    sp = jnp.maximum(jnp.sum(jnp.abs(ctx_t) * ctx_m, -1) / denom, 1e-3)[:, None, None]
    obs = jnp.concatenate([ctx_t / sp[:, :, 0], jnp.zeros((B, P))], 1)[:, :, None]
    m = jnp.concatenate([ctx_m, jnp.zeros((B, P))], 1)[:, :, None]
    feat = jnp.concatenate([past_time_feat[:, -C:], future_time_feat], 1)
    obs_r = jnp.repeat(obs, S, 0)
    m_r = jnp.repeat(m, S, 0)
    feat_r = jnp.repeat(feat, S, 0)
    q = (jnp.tile(jnp.arange(S), B) + 1).astype(jnp.float32) / (S + 1)
    q = q[:, None, None]
    y0 = obs_r * m_r
    x = jnp.concatenate([y0, feat_r], -1)
    h_pre = x @ w1 + b1
    h = jnp.maximum(h_pre, 0.0)
    d = h @ w2 + b2
    e = obs_r - d
    g_e = jnp.where(e >= 0.0, q, q - 1.0)
    dE_dd = -g_e * m_r
    relu_g = (h_pre > 0.0).astype(jnp.float32)
    dd_dy = jnp.sum(relu_g * (w1[0, :] * w2[:, 0]), -1, keepdims=True)
    score = -(dE_dd * dd_dy)
    pred_full = (y0 + base_scale * score)[:, :, 0].reshape(B, S, L) * sp
    return pred_full, pred_full[..., L - P:]


# ----------------------------------------------------------------------------
if __name__ == "__main__":
    key = jax.random.PRNGKey(0)
    ks = jax.random.split(key, 8)

    B, S = 2, 2                 # batch, num_samples
    C, P = 24, 8                # context_length, prediction_length
    past_len = C + 8
    F_feat = 4                  # time-feature dim
    H = 32                      # denoiser hidden dim

    past_target = jax.random.normal(ks[0], (B, past_len), jnp.float32) * 2.0 + 5.0
    past_observed = (jax.random.uniform(ks[1], (B, past_len)) > 0.1).astype(jnp.float32)
    past_time_feat = jax.random.normal(ks[2], (B, past_len, F_feat), jnp.float32)
    future_time_feat = jax.random.normal(ks[3], (B, P, F_feat), jnp.float32)

    # deterministic synthetic fast_denoise MLP weights
    w1 = jax.random.normal(ks[4], (1 + F_feat, H), jnp.float32) * 0.1
    b1 = jnp.zeros((1, H), jnp.float32)
    w2 = jax.random.normal(ks[5], (H, 1), jnp.float32) * 0.1
    b2 = jnp.zeros((1, 1), jnp.float32)
    params = (w1, b1, w2, b2)

    out, out_full = guidance_forward(
        past_target, past_observed, past_time_feat, future_time_feat,
        context_length=C, prediction_length=P, num_samples=S,
        denoiser_params=params, base_scale=1.0, return_full=True)
    jax.block_until_ready(out)
    assert out.shape == (B, S, P)
    assert out_full.shape == (B, S, C + P)

    ref_full, ref = _reference_forward(past_target, past_observed,
                                       past_time_feat, future_time_feat,
                                       C, P, S, params, 1.0)
    assert jnp.allclose(out_full, ref_full, atol=1e-3, rtol=1e-3), \
        "full-window mismatch vs reference"
    assert jnp.allclose(out, ref, atol=1e-3, rtol=1e-3), "mismatch vs reference"

    print("KERNEL_OK")
</pallas_src>

<mosaic_0001>
module attributes {stable_mosaic.version = 11 : i64} {
  func.func @_guidance_score_kernel(%arg0: i32, %arg1: memref<2xf32, #tpu.memory_space<smem>>, %arg2: memref<8x1xf32, #tpu.memory_space<vmem>>, %arg3: memref<8x128xf32, #tpu.memory_space<vmem>>, %arg4: memref<32x8xf32, #tpu.memory_space<vmem>>, %arg5: memref<32x1xf32, #tpu.memory_space<vmem>>, %arg6: memref<2x64xf32, #tpu.memory_space<vmem>>, %arg7: memref<8x128xf32, #tpu.memory_space<vmem>>) attributes {dimension_semantics = [#tpu.dimension_semantics<parallel>], iteration_bounds = array<i64: 1>, scalar_prefetch = 0 : i64, scratch_operands = 0 : i64, tpu.core_type = #tpu.core_type<tc>, window_params = [{transform_indices = @transform_0, window_bounds = array<i64: 2>}, {pipeline_mode = #tpu.pipeline_mode<synchronous>, transform_indices = @transform_1, window_bounds = array<i64: 8, 1>}, {transform_indices = @transform_2, window_bounds = array<i64: 8, 128>}, {pipeline_mode = #tpu.pipeline_mode<synchronous>, transform_indices = @transform_3, window_bounds = array<i64: 32, 8>}, {pipeline_mode = #tpu.pipeline_mode<synchronous>, transform_indices = @transform_4, window_bounds = array<i64: 32, 1>}, {pipeline_mode = #tpu.pipeline_mode<synchronous>, transform_indices = @transform_5, window_bounds = array<i64: 2, 64>}, {transform_indices = @transform_6, window_bounds = array<i64: 8, 128>}]} {
    %c0 = arith.constant 0 : index
    %0 = memref.load %arg1[%c0] : memref<2xf32, #tpu.memory_space<smem>>
    %c1 = arith.constant 1 : index
    %1 = memref.load %arg1[%c1] : memref<2xf32, #tpu.memory_space<smem>>
    %c0_0 = arith.constant 0 : index
    %c0_1 = arith.constant 0 : index
    %2 = vector.load %arg3[%c0_0, %c0_1] : memref<8x128xf32, #tpu.memory_space<vmem>>, vector<8x128xf32>
    %3 = vector.extract_strided_slice %2 {offsets = [0, 0], sizes = [1, 128], strides = [1, 1]} : vector<8x128xf32> to vector<1x128xf32>
    %4 = vector.extract_strided_slice %2 {offsets = [1, 0], sizes = [1, 128], strides = [1, 1]} : vector<8x128xf32> to vector<1x128xf32>
    %5 = vector.extract_strided_slice %2 {offsets = [2, 0], sizes = [1, 128], strides = [1, 1]} : vector<8x128xf32> to vector<1x128xf32>
    %6 = vector.extract_strided_slice %2 {offsets = [3, 0], sizes = [1, 128], strides = [1, 1]} : vector<8x128xf32> to vector<1x128xf32>
    %c0_2 = arith.constant 0 : index
    %c0_3 = arith.constant 0 : index
    %7 = vector.load %arg4[%c0_2, %c0_3] : memref<32x8xf32, #tpu.memory_space<vmem>>, vector<32x8xf32>
    %cst = arith.constant dense<0.000000e+00> : vector<32x128xf32>
    %8 = tpu.matmul %7, %2, %cst {dimension_numbers = #tpu.dot_dimension_numbers<[1], [0], [0], [1], [0, 0, 1, 1], [], []>} : vector<32x8xf32>, vector<8x128xf32>, vector<32x128xf32> -> vector<32x128xf32>
    %c0_4 = arith.constant 0 : index
    %c0_5 = arith.constant 0 : index
    %9 = vector.load %arg5[%c0_4, %c0_5] : memref<32x1xf32, #tpu.memory_space<vmem>>, vector<32x1xf32>
    %10 = vector.broadcast %9 : vector<32x1xf32> to vector<32x128xf32>
    %11 = arith.addf %8, %10 : vector<32x128xf32>
    %cst_6 = arith.constant 0.000000e+00 : f32
    %12 = vector.broadcast %cst_6 : f32 to vector<32x128xf32>
    %13 = arith.maximumf %11, %12 : vector<32x128xf32>
    %cst_7 = arith.constant 0.000000e+00 : f32
    %14 = vector.broadcast %cst_7 : f32 to vector<32x128xf32>
    %15 = arith.cmpf ogt, %11, %14 : vector<32x128xf32>
    %16 = arith.extui %15 : vector<32x128xi1> to vector<32x128xi32>
    %17 = arith.sitofp %16 : vector<32x128xi32> to vector<32x128xf32>
    %18 = tpu.concatenate %13, %17 in 0 : vector<32x128xf32>, vector<32x128xf32> -> vector<64x128xf32>
    %c0_8 = arith.constant 0 : index
    %c0_9 = arith.constant 0 : index
    %19 = vector.load %arg6[%c0_8, %c0_9] : memref<2x64xf32, #tpu.memory_space<vmem>>, vector<2x64xf32>
    %cst_10 = arith.constant dense<0.000000e+00> : vector<2x128xf32>
    %20 = tpu.matmul %19, %18, %cst_10 {dimension_numbers = #tpu.dot_dimension_numbers<[1], [0], [0], [1], [0, 0, 1, 1], [], []>} : vector<2x64xf32>, vector<64x128xf32>, vector<2x128xf32> -> vector<2x128xf32>
    %21 = vector.extract_strided_slice %20 {offsets = [0, 0], sizes = [1, 128], strides = [1, 1]} : vector<2x128xf32> to vector<1x128xf32>
    %22 = vector.broadcast %1 : f32 to vector<1x128xf32>
    %23 = arith.addf %21, %22 : vector<1x128xf32>
    %24 = vector.extract_strided_slice %20 {offsets = [1, 0], sizes = [1, 128], strides = [1, 1]} : vector<2x128xf32> to vector<1x128xf32>
    %25 = arith.subf %4, %23 : vector<1x128xf32>
    %26 = vector.broadcast %0 : f32 to vector<1x128xf32>
    %27 = arith.mulf %26, %5 : vector<1x128xf32>
    %28 = arith.mulf %27, %6 : vector<1x128xf32>
    %29 = arith.mulf %28, %24 : vector<1x128xf32>
    %c0_11 = arith.constant 0 : index
    %c0_12 = arith.constant 0 : index
    %30 = vector.load %arg2[%c0_11, %c0_12] : memref<8x1xf32, #tpu.memory_space<vmem>>, vector<8x1xf32>
    %cst_13 = arith.constant 0.000000e+00 : f32
    %31 = vector.broadcast %cst_13 : f32 to vector<1x128xf32>
    %32 = arith.cmpf olt, %25, %31 : vector<1x128xf32>
    %33 = arith.extui %32 : vector<1x128xi1> to vector<1x128xi32>
    %34 = arith.sitofp %33 : vector<1x128xi32> to vector<1x128xf32>
    %35 = vector.broadcast %30 : vector<8x1xf32> to vector<8x128xf32>
    %36 = vector.broadcast %34 : vector<1x128xf32> to vector<8x128xf32>
    %37 = arith.subf %35, %36 : vector<8x128xf32>
    %38 = arith.mulf %3, %6 : vector<1x128xf32>
    %39 = vector.broadcast %29 : vector<1x128xf32> to vector<8x128xf32>
    %40 = arith.mulf %37, %39 : vector<8x128xf32>
    %41 = vector.broadcast %38 : vector<1x128xf32> to vector<8x128xf32>
    %42 = arith.addf %41, %40 : vector<8x128xf32>
    %c0_14 = arith.constant 0 : index
    %c0_15 = arith.constant 0 : index
    %43 = vector.load %arg7[%c0_14, %c0_15] : memref<8x128xf32, #tpu.memory_space<vmem>>, vector<8x128xf32>
    tpu.vector_store %arg7[%c0_14, %c0_15], %42 {strides = array<i32>} : memref<8x128xf32, #tpu.memory_space<vmem>>, vector<8x128xf32>,
    return
  }
  func.func @transform_0(%arg0: i32) -> i32 {
    %c0_i32 = arith.constant 0 : i32
    %c0_i32_0 = arith.constant 0 : i32
    return %c0_i32 : i32
  }
  func.func @transform_1(%arg0: i32) -> (i32, i32) {
    %c0_i32 = arith.constant 0 : i32
    %c0_i32_0 = arith.constant 0 : i32
    %c0_i32_1 = arith.constant 0 : i32
    return %c0_i32, %c0_i32_0 : i32, i32
  }
  func.func @transform_2(%arg0: i32) -> (i32, i32) {
    %c0_i32 = arith.constant 0 : i32
    %c0_i32_0 = arith.constant 0 : i32
    return %c0_i32, %arg0 : i32, i32
  }
  func.func @transform_3(%arg0: i32) -> (i32, i32) {
    %c0_i32 = arith.constant 0 : i32
    %c0_i32_0 = arith.constant 0 : i32
    %c0_i32_1 = arith.constant 0 : i32
    return %c0_i32, %c0_i32_0 : i32, i32
  }
  func.func @transform_4(%arg0: i32) -> (i32, i32) {
    %c0_i32 = arith.constant 0 : i32
    %c0_i32_0 = arith.constant 0 : i32
    %c0_i32_1 = arith.constant 0 : i32
    return %c0_i32, %c0_i32_0 : i32, i32
  }
  func.func @transform_5(%arg0: i32) -> (i32, i32) {
    %c0_i32 = arith.constant 0 : i32
    %c0_i32_0 = arith.constant 0 : i32
    %c0_i32_1 = arith.constant 0 : i32
    return %c0_i32, %c0_i32_0 : i32, i32
  }
  func.func @transform_6(%arg0: i32) -> (i32, i32) {
    %c0_i32 = arith.constant 0 : i32
    %c0_i32_0 = arith.constant 0 : i32
    return %c0_i32, %arg0 : i32, i32
  }
}

</mosaic_0001>

<llo_original>
// kernel: tpu_custom_call.1
$region0: #{tpu_custom_call.1}
  #allocation0 [shape = 'u32[]', space=smem, size = 0x4, offset = 0x4, fixed_abs, tag = 'smem constant byte address 0x4 - core index']
  #allocation1 [shape = 'u32[144,128]{1,0:T(1,128)}', space=vmem, size = 0x12000, scoped, tag = 'internal scratch']
  %s0 = inlined_call_operand.vmem [shape: f32[2], index: 0, kind: input, shape index: {}]
  %s1 = inlined_call_operand.vmem [shape: f32[8,1], index: 1, kind: input, shape index: {}]
  %s2 = inlined_call_operand.vmem [shape: f32[8,128], index: 2, kind: input, shape index: {}]
  %s3 = inlined_call_operand.vmem [shape: f32[32,8], index: 3, kind: input, shape index: {}]
  %s4 = inlined_call_operand.vmem [shape: f32[32,1], index: 4, kind: input, shape index: {}]
  %s5 = inlined_call_operand.vmem [shape: f32[2,64], index: 5, kind: input, shape index: {}]
  %s6 = inlined_call_operand.hbm [shape: f32[8,128], index: 6, kind: output, shape index: {}]
  %s7 = sld [smem:[#allocation0]]
  $region38: #{tpu_custom_call.1} parent=0
    _
  %s9 = ssub.s32 1, %s7
  %s10 = scalar_select 0, %s9, %s7
  $region1: #{tpu_custom_call.1} parent=0
    #allocation2 [shape = 'u8[512]{0}', space=smem, size = 0x200, scoped, tag = 'input window, operand 0, single buffered']
    #allocation3 [shape = 's32[1]{0}', space=sflag, size = 0x4, scoped, tag = 'scoped memory for tpu_custom_call.1']
    #allocation4 [shape = 's32[1]{0}', space=sflag, size = 0x4, scoped, tag = 'scoped memory for tpu_custom_call.1']
    #allocation5 [shape = 'u8[4096]{0}', space=vmem, size = 0x1000, scoped, tag = 'output window, operand 0, single buffered']
    %11 = vsyncpa [#allocation4], 0
    %12 = vsyncpa [#allocation3], 0
    // Predicated region
    $region2: #{tpu_custom_call.1} parent=1 // pred_check
      _
    $region3: #{tpu_custom_call.1} parent=1 // pred_check_branch
      %14 = sbr.rel (0) target = $region5
    $region4: #{tpu_custom_call.1} parent=1 // pred_region
      %s16 = ssub.s32 16, 16
      %17 = vsyncadd [#allocation4], %s16
      %s19 = sshll.u32 %s0, 4
      %s20 = int_to_ptr.vmem [resolvable:$true] %s19
      %22 = dma.vmem_to_smem %s20, 16, [#allocation2], [#allocation4]
    $region5: #{tpu_custom_call.1} parent=1 // pred_fallthru
      _
    // Predicated region
    $region6: #{tpu_custom_call.1} parent=1 // pred_check
      _
    $region7: #{tpu_custom_call.1} parent=1 // pred_check_branch
      %24 = sbr.rel (0) target = $region9
    $region8: #{tpu_custom_call.1} parent=1 // pred_region
      _
    $region9: #{tpu_custom_call.1} parent=1 // pred_fallthru
      _
    // Predicated region
    $region10: #{tpu_custom_call.1} parent=1 // pred_check
      _
    $region11: #{tpu_custom_call.1} parent=1 // pred_check_branch
      %26 = sbr.rel (0) target = $region13
    $region12: #{tpu_custom_call.1} parent=1 // pred_region
      _
    $region13: #{tpu_custom_call.1} parent=1 // pred_fallthru
      _
    // Predicated region
    $region14: #{tpu_custom_call.1} parent=1 // pred_check
      _
    $region15: #{tpu_custom_call.1} parent=1 // pred_check_branch
      %28 = sbr.rel (0) target = $region17
    $region16: #{tpu_custom_call.1} parent=1 // pred_region
      _
    $region17: #{tpu_custom_call.1} parent=1 // pred_fallthru
      _
    // Predicated region
    $region18: #{tpu_custom_call.1} parent=1 // pred_check
      _
    $region19: #{tpu_custom_call.1} parent=1 // pred_check_branch
      %30 = sbr.rel (0) target = $region21
    $region20: #{tpu_custom_call.1} parent=1 // pred_region
      _
    $region21: #{tpu_custom_call.1} parent=1 // pred_fallthru
      _
    // Predicated region
    $region22: #{tpu_custom_call.1} parent=1 // pred_check
      _
    $region23: #{tpu_custom_call.1} parent=1 // pred_check_branch
      %32 = sbr.rel (0) target = $region25
    $region24: #{tpu_custom_call.1} parent=1 // pred_region
      _
    $region25: #{tpu_custom_call.1} parent=1 // pred_fallthru
      _
    // Predicated region
    $region26: #{tpu_custom_call.1} parent=1 // pred_check
      _
    $region27: #{tpu_custom_call.1} parent=1 // pred_check_branch
      %34 = sbr.rel (0) target = $region29
    $region28: #{tpu_custom_call.1} parent=1 // pred_region
      %35 = dma.done [#allocation4], 16
    $region29: #{tpu_custom_call.1} parent=1 // pred_fallthru
      _
    %36 = sfence
    %s37 = sld [smem:[#allocation2]]
    %s38 = sld [smem:[#allocation2 + $0x1]]
    %v39 = vld [vmem:[%s2] sm:$0xff]
    %v40 = vld [vmem:[%s3] sm:$0xff]
    %v41 = vld [vmem:[%s3 + $0x8] sm:$0xff]
    %v42 = vld [vmem:[%s3 + $0x10] sm:$0xff]
    %v43 = vld [vmem:[%s3 + $0x18] sm:$0xff]
    %v44 = vld [vmem:[%s4] sm:$0xff]
    %v45 = vld [vmem:[%s4 + $0x8] sm:$0xff]
    %v46 = vld [vmem:[%s4 + $0x10] sm:$0xff]
    %v47 = vld [vmem:[%s4 + $0x18] sm:$0xff]
    %49 = vset.pattern.permute.xlu0 0
    %50 = vperm.xlu0 %49, %v44
    %v51 = vpop.permute.xlu0 %50
    %54 = vset.pattern.permute.xlu0 0
    %55 = vperm.xlu0 %54, %v45
    %v56 = vpop.permute.xlu0 %55
    %59 = vset.pattern.permute.xlu0 0
    %60 = vperm.xlu0 %59, %v46
    %v61 = vpop.permute.xlu0 %60
    %64 = vset.pattern.permute.xlu0 0
    %65 = vperm.xlu0 %64, %v47
    %v66 = vpop.permute.xlu0 %65
    %vm68 = vcmask 64512
    %v70 = vsel %vm68, %v40, 0
    %v73 = vsel %vm68, %v41, 0
    %v76 = vsel %vm68, %v42, 0
    %v79 = vsel %vm68, %v43, 0
    %81 = vmatprep.subr.mxu0 0.0
    %82 = vmatpush1.msra.mxu0 0.0
    %83 = vmatprep.subr.mxu0 0.0
    %84 = vmatpush1.msra.mxu0 0.0
    %85 = vmatprep.subr.mxu0 0.0
    %86 = vmatpush1.msra.mxu0 0.0
    %87 = vmatprep.subr.mxu0 0.0
    %88 = vmatpush1.msra.mxu0 0.0
    %89 = vmatprep.subr.mxu0 0.0
    %90 = vmatpush1.msra.mxu0 0.0
    %91 = vmatprep.subr.mxu0 0.0
    %92 = vmatpush1.msra.mxu0 0.0
    %93 = vmatprep.subr.mxu0 0.0
    %94 = vmatpush1.msra.mxu0 0.0
    %95 = vmatprep.subr.mxu0 0.0
    %96 = vmatpush1.msra.mxu0 0.0
    %97 = vmatprep.subr.mxu0 0.0
    %98 = vmatpush1.msra.mxu0 0.0
    %99 = vmatprep.subr.mxu0 0.0
    %100 = vmatpush1.msra.mxu0 0.0
    %101 = vmatprep.subr.mxu0 0.0
    %102 = vmatpush1.msra.mxu0 0.0
    %103 = vmatprep.subr.mxu0 0.0
    %104 = vmatpush1.msra.mxu0 0.0
    %105 = vmatprep.subr.mxu0 0.0
    %106 = vmatpush1.msra.mxu0 0.0
    %107 = vmatprep.subr.mxu0 0.0
    %108 = vmatpush1.msra.mxu0 0.0
    %109 = vmatprep.subr.mxu0 0.0
    %110 = vmatpush1.msra.mxu0 0.0
    %111 = vmatprep.subr.mxu0 0.0
    %112 = vmatpush1.msra.mxu0 %v39
    %113 = vmatprep.subr.mxu0 0.0
    %114 = vmatpush2.msra.mxu0 0.0
    %115 = vmatprep.subr.mxu0 0.0
    %116 = vmatpush2.msra.mxu0 0.0
    %117 = vmatprep.subr.mxu0 0.0
    %118 = vmatpush2.msra.mxu0 0.0
    %119 = vmatprep.subr.mxu0 0.0
    %120 = vmatpush2.msra.mxu0 0.0
    %121 = vmatprep.subr.mxu0 0.0
    %122 = vmatpush2.msra.mxu0 0.0
    %123 = vmatprep.subr.mxu0 0.0
    %124 = vmatpush2.msra.mxu0 0.0
    %125 = vmatprep.subr.mxu0 0.0
    %126 = vmatpush2.msra.mxu0 0.0
    %127 = vmatprep.subr.mxu0 0.0
    %128 = vmatpush2.msra.mxu0 0.0
    %129 = vmatprep.subr.mxu0 0.0
    %130 = vmatpush2.msra.mxu0 0.0
    %131 = vmatprep.subr.mxu0 0.0
    %132 = vmatpush2.msra.mxu0 0.0
    %133 = vmatprep.subr.mxu0 0.0
    %134 = vmatpush2.msra.mxu0 0.0
    %135 = vmatprep.subr.mxu0 0.0
    %136 = vmatpush2.msra.mxu0 0.0
    %137 = vmatprep.subr.mxu0 0.0
    %138 = vmatpush2.msra.mxu0 0.0
    %139 = vmatprep.subr.mxu0 0.0
    %140 = vmatpush2.msra.mxu0 0.0
    %141 = vmatprep.subr.mxu0 0.0
    %142 = vmatpush2.msra.mxu0 0.0
    %143 = vmatprep.subr.mxu0 0.0
    %144 = vmatpush2.msra.mxu0 0.0
    %145 = vmatprep.mubr.f32.mxu0 0.0
    %146 = vmatmul.mubr.f32.gmra.mxu0 %v70
    %v147 = vpop.f32.mrf.mxu0
    %v148 = vadd.f32 %v51, %v147
    %v149 = vpop.f32.mrf.mxu0
    %150 = vmatprep.mubr.f32.mxu0 0.0
    %151 = vmatmul.mubr.f32.gmra.mxu0 %v73
    %v152 = vpop.f32.mrf.mxu0
    %v153 = vadd.f32 %v56, %v152
    %v154 = vpop.f32.mrf.mxu0
    %155 = vmatprep.mubr.f32.mxu0 0.0
    %156 = vmatmul.mubr.f32.gmra.mxu0 %v76
    %v157 = vpop.f32.mrf.mxu0
    %v158 = vadd.f32 %v61, %v157
    %v159 = vpop.f32.mrf.mxu0
    %160 = vmatprep.mubr.f32.mxu0 0.0
    %161 = vmatmul.mubr.f32.gmra.mxu0 %v79
    %v162 = vpop.f32.mrf.mxu0
    %v163 = vadd.f32 %v66, %v162
    %v164 = vpop.f32.mrf.mxu0
    %165 = vdwg.mxu0
    %v166 = vmax.f32 %v148, 0.0
    %v167 = vmax.f32 %v153, 0.0
    %v168 = vmax.f32 %v158, 0.0
    %v169 = vmax.f32 %v163, 0.0
    %vm170 = vcmp.gt.f32.partialorder %v148, 0.0
    %vm171 = vcmp.gt.f32.partialorder %v153, 0.0
    %vm172 = vcmp.gt.f32.partialorder %v158, 0.0
    %vm173 = vcmp.gt.f32.partialorder %v163, 0.0
    %v174 = vsel %vm170, 1, 0
    %v175 = vsel %vm171, 1, 0
    %v176 = vsel %vm172, 1, 0
    %v177 = vsel %vm173, 1, 0
    %v178 = vcvt.s32.f32 %v174
    %v179 = vcvt.s32.f32 %v175
    %v180 = vcvt.s32.f32 %v176
    %v181 = vcvt.s32.f32 %v177
    %v182 = vld [vmem:[%s5] sm:$0x3]
    %vm183 = vcmask 523264
    %v185 = vsel %vm183, %v182, 0
    %187 = vmatprep.subr.mxu0 0.0
    %188 = vmatpush1.msra.mxu0 0.0
    %189 = vmatprep.subr.mxu0 0.0
    %190 = vmatpush1.msra.mxu0 0.0
    %191 = vmatprep.subr.mxu0 0.0
    %192 = vmatpush1.msra.mxu0 0.0
    %193 = vmatprep.subr.mxu0 0.0
    %194 = vmatpush1.msra.mxu0 0.0
    %195 = vmatprep.subr.mxu0 0.0
    %196 = vmatpush1.msra.mxu0 0.0
    %197 = vmatprep.subr.mxu0 0.0
    %198 = vmatpush1.msra.mxu0 0.0
    %199 = vmatprep.subr.mxu0 0.0
    %200 = vmatpush1.msra.mxu0 0.0
    %201 = vmatprep.subr.mxu0 0.0
    %202 = vmatpush1.msra.mxu0 0.0
    %203 = vmatprep.subr.mxu0 0.0
    %204 = vmatpush1.msra.mxu0 %v181
    %205 = vmatprep.subr.mxu0 0.0
    %206 = vmatpush1.msra.mxu0 %v180
    %207 = vmatprep.subr.mxu0 0.0
    %208 = vmatpush1.msra.mxu0 %v179
    %209 = vmatprep.subr.mxu0 0.0
    %210 = vmatpush1.msra.mxu0 %v178
    %211 = vmatprep.subr.mxu0 0.0
    %212 = vmatpush1.msra.mxu0 %v169
    %213 = vmatprep.subr.mxu0 0.0
    %214 = vmatpush1.msra.mxu0 %v168
    %215 = vmatprep.subr.mxu0 0.0
    %216 = vmatpush1.msra.mxu0 %v167
    %217 = vmatprep.subr.mxu0 0.0
    %218 = vmatpush1.msra.mxu0 %v166
    %219 = vmatprep.subr.mxu0 0.0
    %220 = vmatpush2.msra.mxu0 0.0
    %221 = vmatprep.subr.mxu0 0.0
    %222 = vmatpush2.msra.mxu0 0.0
    %223 = vmatprep.subr.mxu0 0.0
    %224 = vmatpush2.msra.mxu0 0.0
    %225 = vmatprep.subr.mxu0 0.0
    %226 = vmatpush2.msra.mxu0 0.0
    %227 = vmatprep.subr.mxu0 0.0
    %228 = vmatpush2.msra.mxu0 0.0
    %229 = vmatprep.subr.mxu0 0.0
    %230 = vmatpush2.msra.mxu0 0.0
    %231 = vmatprep.subr.mxu0 0.0
    %232 = vmatpush2.msra.mxu0 0.0
    %233 = vmatprep.subr.mxu0 0.0
    %234 = vmatpush2.msra.mxu0 0.0
    %235 = vmatprep.subr.mxu0 0.0
    %236 = vmatpush2.msra.mxu0 0.0
    %237 = vmatprep.subr.mxu0 0.0
    %238 = vmatpush2.msra.mxu0 0.0
    %239 = vmatprep.subr.mxu0 0.0
    %240 = vmatpush2.msra.mxu0 0.0
    %241 = vmatprep.subr.mxu0 0.0
    %242 = vmatpush2.msra.mxu0 0.0
    %243 = vmatprep.subr.mxu0 0.0
    %244 = vmatpush2.msra.mxu0 0.0
    %245 = vmatprep.subr.mxu0 0.0
    %246 = vmatpush2.msra.mxu0 0.0
    %247 = vmatprep.subr.mxu0 0.0
    %248 = vmatpush2.msra.mxu0 0.0
    %249 = vmatprep.subr.mxu0 0.0
    %250 = vmatpush2.msra.mxu0 0.0
    %251 = vmatprep.mubr.f32.mxu0 0.0
    %252 = vmatmul.mubr.f32.gmra.mxu0 %v185
    %v253 = vpop.f32.mrf.mxu0
    %v254 = vadd.f32 0.0, %v253
    %v255 = vpop.f32.mrf.mxu0
    %256 = vdwg.mxu0
    %v257 = vstv %s38
    %v258 = vadd.f32 %v254, %v257
    %v260 = vrot.slane %v258, 7
    %v262 = vsub.f32 %v39, %v260
    %v263 = vstv %s37
    %v264 = vmul.f32 %v263, %v39
    %v266 = vrot.slane %v39, 1
    %v268 = vmul.f32 %v264, %v266
    %v270 = vrot.slane %v254, 7
    %v272 = vmul.f32 %v268, %v270
    %v273 = vld [vmem:[%s1] sm:$0xff]
    %vm274 = vcmp.lt.f32.partialorder %v262, 0.0
    %v275 = vsel %vm274, 1, 0
    %v276 = vcvt.s32.f32 %v275
    %278 = vset.pattern.permute.xlu0 0
    %279 = vperm.xlu0 %278, %v273
    %v280 = vpop.permute.xlu0 %279
    %v282 = vlaneseq
    %v283 = vshrl.u32 %v282, 7
    %v284 = vsub.s32 1, %v283
    %v285 = vrot.slane %v276, %v284
    %v286 = vsub.f32 %v280, %v285
    %v287 = vrot.slane %v39, 3
    %v289 = vmul.f32 %v39, %v287
    %v290 = vlaneseq
    %v291 = vshrl.u32 %v290, 7
    %v292 = vsub.s32 2, %v291
    %v293 = vrot.slane %v272, %v292
    %v294 = vmul.f32 %v286, %v293
    %v295 = vlaneseq
    %v296 = vshrl.u32 %v295, 7
    %v297 = vsub.s32 0, %v296
    %v298 = vrot.slane %v289, %v297
    %v299 = vadd.f32 %v298, %v294
    %300 = vst [vmem:[#allocation5] sm:$0xff] %v299
    // Predicated region
    $region30: #{tpu_custom_call.1} parent=1 // pred_check
      _
    $region31: #{tpu_custom_call.1} parent=1 // pred_check_branch
      %302 = sbr.rel (0) target = $region33
    $region32: #{tpu_custom_call.1} parent=1 // pred_region
      %s304 = ssub.s32 128, 128
      %305 = vsyncadd [#allocation3], %s304
      %s307 = sshll.u32 [#allocation5], 4
      %s308 = int_to_ptr.vmem [resolvable:$true] %s307
      %310 = dma.vmem_to_hbm [thread:$0]  %s308, 128, %s6, [#allocation3]
    $region33: #{tpu_custom_call.1} parent=1 // pred_fallthru
      _
    // Predicated region
    $region34: #{tpu_custom_call.1} parent=1 // pred_check
      _
    $region35: #{tpu_custom_call.1} parent=1 // pred_check_branch
      %312 = sbr.rel (0) target = $region37
    $region36: #{tpu_custom_call.1} parent=1 // pred_region
      %313 = dma.done [#allocation3], 128
    $region37: #{tpu_custom_call.1} parent=1 // pred_fallthru
      _
    %314 = vsyncpa [#allocation3], 1
    %315 = vsyncpa [#allocation4], 1

</llo_original>
